<compile_context>
chip_gen: v5e
topology: v5e:2x2
jax: 0.10.0
libtpu: 0.0.40
codegen_flags: <defaults>
</compile_context>

<pallas_src>
import functools

import numpy as np
import jax
import jax.numpy as jnp
from jax.experimental import pallas as pl
from jax.experimental.pallas import tpu as pltpu


# ----------------------------------------------------------------------------
# pltpu.roll convention probe (cached).  We need np.roll semantics
# (result[..., p] = v[..., (p - shift) % n]); the probe determines whether
# pltpu.roll matches that, is inverted, or cannot be used (concat fallback).
# ----------------------------------------------------------------------------
_ROLL_MODE_CACHE = {}


def _get_roll_mode(n, cb, hw, w):
    key = (n, cb, hw, w)
    if key in _ROLL_MODE_CACHE:
        return _ROLL_MODE_CACHE[key]

    big = (hw - w) % hw  # also exercise a large (multi-vreg) rotation amount

    def probe_kernel(x_ref, o1_ref, o2_ref):
        o1_ref[...] = pltpu.roll(x_ref[...], 1, axis=2)
        o2_ref[...] = pltpu.roll(x_ref[...], big, axis=2)

    mode = "concat"
    try:
        x = jnp.arange(n * cb * hw, dtype=jnp.float32).reshape(n, cb, hw)
        o1, o2 = pl.pallas_call(
            probe_kernel,
            out_shape=(jax.ShapeDtypeStruct((n, cb, hw), jnp.float32),
                       jax.ShapeDtypeStruct((n, cb, hw), jnp.float32)),
        )(x)
        o1 = np.asarray(jax.block_until_ready(o1))
        o2 = np.asarray(jax.block_until_ready(o2))
        xn = np.asarray(x)
        if (np.array_equal(o1, np.roll(xn, 1, axis=2))
                and np.array_equal(o2, np.roll(xn, big, axis=2))):
            mode = "np"       # pltpu.roll(v, s): result[p] = v[p - s]
        elif (np.array_equal(o1, np.roll(xn, -1, axis=2))
              and np.array_equal(o2, np.roll(xn, -big, axis=2))):
            mode = "inv"      # pltpu.roll(v, s): result[p] = v[p + s]
    except Exception:
        mode = "concat"
    _ROLL_MODE_CACHE[key] = mode
    return mode


# ----------------------------------------------------------------------------
# Kernel
# ----------------------------------------------------------------------------
def _spatial_fusion_kernel(params_ref, masks_ref, x_ref, o_ref, acc_ref, *,
                           w, eps, inv_cnt, roll_mode):
    """One grid step: Cb channels, all batches, full spatial extent.

    params_ref: VMEM (11, Cb, 1) f32  rows 0..8 = conv taps (kh*3+kw),
                                      row 9 = gamma, row 10 = beta
    masks_ref:  VMEM (4, 1, HW) f32   [0] col != 0   (left-neighbor valid)
                                      [1] col != W-1 (right-neighbor valid)
                                      [2] row != 0   (up-neighbor valid)
                                      [3] row != H-1 (down-neighbor valid)
    x_ref:      VMEM (N, Cb, HW)      flattened input slab
    o_ref:      VMEM (N, Cb, HW)      flattened output slab
    acc_ref:    VMEM (N, Cb, HW) f32  explicit conv accumulator
    """
    n, cb, hw = x_ref.shape

    x = x_ref[...].astype(jnp.float32)           # single slab load
    prm = params_ref[...].astype(jnp.float32)    # (11, Cb, 1)
    msk = masks_ref[...]                         # (4, 1, HW)

    def roll_hw(v, s):
        # np.roll semantics on the flattened-HW lane axis:
        #   result[..., p] = v[..., (p - s) % hw]
        s = s % hw
        if s == 0:
            return v
        if roll_mode == "np":
            return pltpu.roll(v, s, axis=2)
        if roll_mode == "inv":
            return pltpu.roll(v, hw - s, axis=2)
        return jnp.concatenate([v[..., hw - s:], v[..., :hw - s]], axis=-1)

    # Row-shifted slabs (XLU rotates); row-validity masks folded in ONCE each.
    xu = roll_hw(x, w) * msk[2]     # x[r-1, c], zero on the top image row
    xd = roll_hw(x, -w) * msk[3]    # x[r+1, c], zero on the bottom image row
    xm = x                          # x[r, c]

    # Depthwise 3x3 conv, grouped by kernel column.  Per-channel tap weights
    # (Cb, 1) broadcast over (batch, lanes); column masks applied once per
    # edge group after the +/-1 lane roll.  Conv bias omitted: it cancels
    # exactly under training-mode BatchNorm.
    c_sum = xu * prm[1] + xm * prm[4] + xd * prm[7]        # kw = 1 (center)
    l_pre = xu * prm[0] + xm * prm[3] + xd * prm[6]        # kw = 0 (left)
    r_pre = xu * prm[2] + xm * prm[5] + xd * prm[8]        # kw = 2 (right)
    acc = c_sum + msk[0] * roll_hw(l_pre, 1) + msk[1] * roll_hw(r_pre, -1)

    # Explicit accumulator buffer: deterministic VMEM footprint, no spills.
    acc_ref[...] = acc

    # ---- BatchNorm2d, training mode (biased batch stats over N, H, W) ------
    # Single fused pass: sum and sum-of-squares, var = E[x^2] - mean^2.
    # TODO(synk): switch to a two-pass / compensated variance if inputs with
    # |mean| >> std need to be supported at tight tolerances.
    a = acc_ref[...]
    s1 = jnp.sum(jnp.sum(a, axis=2, keepdims=True), axis=0, keepdims=True)
    s2 = jnp.sum(jnp.sum(a * a, axis=2, keepdims=True), axis=0, keepdims=True)
    mean = s1 * inv_cnt
    var = jnp.maximum(s2 * inv_cnt - mean * mean, 0.0)
    inv_std = jax.lax.rsqrt(var + eps)
    scale = prm[9] * inv_std                      # gamma / std        (1,Cb,1)
    shift = prm[10] - mean * scale                # beta - mean*gamma/std

    y = acc_ref[...] * scale + shift

    # ---- exact GELU: 0.5*x*(1+erf(x/sqrt(2))) (matches nn.GELU default) ----
    # Kept exact (VALU polynomial) for parity with the PyTorch module; the
    # tanh/EUP approximation would be faster but changes results.
    y = 0.5 * y * (1.0 + jax.lax.erf(y * 0.7071067811865476))

    o_ref[...] = y.astype(o_ref.dtype)


# ----------------------------------------------------------------------------
# Block / VMEM policy
# ----------------------------------------------------------------------------
def _vmem_policy():
    """Returns (block_budget_bytes, vmem_limit_bytes) based on the device."""
    cap = 64 * 1024 * 1024                       # conservative fallback (v7x)
    try:
        info = pltpu.get_tpu_info()
        cap = int(getattr(info, "vmem_capacity_bytes", cap)) or cap
    except Exception:
        pass
    limit = min((cap * 3) // 4, 100 * 1024 * 1024)
    budget = limit // 2                          # headroom for params/masks
    return budget, limit


def _pick_channel_block(num_channels, batch, hw, in_bytes, out_bytes, budget):
    """Channels per grid step.

    Sub-C blocks must be multiples of 8 (sublane rule on the (Cb, HW) minor
    dims); C itself is always legal (full dim).  Footprint counts the two
    double-buffered input blocks, two output blocks and the f32 acc scratch.
    Prefer the largest fitting block that still yields >= 2 grid steps so
    both v7x TensorCores get work.
    """
    def footprint(cb):
        return batch * cb * hw * (2 * in_bytes + 2 * out_bytes + 4)

    cands = [d for d in range(8, num_channels, 8) if num_channels % d == 0]
    cands.append(num_channels)
    fitting = [d for d in cands if footprint(d) <= budget]
    if fitting:
        multi = [d for d in fitting if num_channels // d >= 2]
        return max(multi) if multi else max(fitting)
    # Note: for extremely large N*H*W per channel a spatial grid axis with
    # partial sum/sumsq accumulation would be needed; not required here.
    return min(cands)


# ----------------------------------------------------------------------------
# Wrapper
# ----------------------------------------------------------------------------
@functools.partial(jax.jit,
                   static_argnames=("eps", "cb", "roll_mode", "vmem_limit"))
def _forward_impl(x, conv_w, gamma, beta, *, eps, cb, roll_mode, vmem_limit):
    N, C, H, W = x.shape
    HW = H * W

    # Free minor-dim merge: (N, C, H, W) -> (N, C, H*W). No transpose, no pad.
    # TODO(synk): for H*W not a multiple of 128, pad the HW axis here (and
    # mask pad lanes out of the BN sums) to keep output stores lane-dense.
    x2 = x.reshape(N, C, HW)

    # Per-channel parameters: 9 conv taps + gamma + beta as (11, C, 1) so one
    # row broadcasts over (batch, lanes) inside the kernel.
    params = jnp.concatenate(
        [conv_w.reshape(C, 9).T, gamma.reshape(1, C), beta.reshape(1, C)],
        axis=0).astype(jnp.float32)[:, :, None]

    # Validity masks (tiny host-built constants; proven-safe lowering path).
    p = np.arange(HW)
    col = p % W
    masks = jnp.asarray(
        np.stack([col != 0, col != W - 1, p >= W, p < (H - 1) * W])
        .astype(np.float32)[:, None, :])                       # (4, 1, HW)

    kernel = functools.partial(
        _spatial_fusion_kernel,
        w=W, eps=float(eps), inv_cnt=1.0 / float(N * HW), roll_mode=roll_mode)

    out2 = pl.pallas_call(
        kernel,
        out_shape=jax.ShapeDtypeStruct((N, C, HW), x.dtype),
        grid=(C // cb,),
        in_specs=[
            pl.BlockSpec((11, cb, 1), lambda c: (0, c, 0)),    # params
            pl.BlockSpec((4, 1, HW), lambda c: (0, 0, 0)),     # masks
            pl.BlockSpec((N, cb, HW), lambda c: (0, c, 0)),    # input slab
        ],
        out_specs=pl.BlockSpec((N, cb, HW), lambda c: (0, c, 0)),
        scratch_shapes=[pltpu.VMEM((N, cb, HW), jnp.float32)],  # explicit acc
        compiler_params=pltpu.CompilerParams(
            dimension_semantics=("parallel",),
            vmem_limit_bytes=int(vmem_limit)),
    )(params, masks, x2)

    return out2.reshape(N, C, H, W)


def spatial_fusion_forward(x, conv_w, conv_b, gamma, beta, eps=1e-5):
    """x: (N, C, H, W); conv_w: (C, 1, 3, 3); conv_b/gamma/beta: (C,)."""
    del conv_b  # cancelled exactly by training-mode BatchNorm mean subtraction
    N, C, H, W = x.shape
    HW = H * W
    budget, limit = _vmem_policy()
    cb = _pick_channel_block(C, N, HW, x.dtype.itemsize, x.dtype.itemsize,
                             budget)
    roll_mode = _get_roll_mode(N, cb, HW, W)
    return _forward_impl(x, conv_w, gamma, beta, eps=float(eps), cb=cb,
                         roll_mode=roll_mode, vmem_limit=limit)


# ----------------------------------------------------------------------------
# Pure-JAX reference (mirrors the PyTorch module, training-mode BN)
# ----------------------------------------------------------------------------
def spatial_fusion_reference(x, conv_w, conv_b, gamma, beta, eps=1e-5):
    C = x.shape[1]
    out = jax.lax.conv_general_dilated(
        x, conv_w,
        window_strides=(1, 1), padding=((1, 1), (1, 1)),
        dimension_numbers=("NCHW", "OIHW", "NCHW"),
        feature_group_count=C)
    out = out + conv_b[None, :, None, None]
    mean = out.mean(axis=(0, 2, 3), keepdims=True)
    var = ((out - mean) ** 2).mean(axis=(0, 2, 3), keepdims=True)
    out = (out - mean) * jax.lax.rsqrt(var + eps)
    out = out * gamma[None, :, None, None] + beta[None, :, None, None]
    return 0.5 * out * (1.0 + jax.lax.erf(out / jnp.sqrt(2.0)))


if __name__ == "__main__":
    key = jax.random.PRNGKey(0)
    kx, kw, kb, kg, kbeta = jax.random.split(key, 5)

    N, C, H, W = 2, 4, 16, 16
    x = jax.random.normal(kx, (N, C, H, W), dtype=jnp.float32)

    # Deterministic synthetic parameters (shapes from nn.Conv2d / nn.BatchNorm2d).
    conv_w = 0.2 * jax.random.normal(kw, (C, 1, 3, 3), dtype=jnp.float32)
    conv_b = 0.1 * jax.random.normal(kb, (C,), dtype=jnp.float32)
    gamma = 1.0 + 0.1 * jax.random.normal(kg, (C,), dtype=jnp.float32)
    beta = 0.1 * jax.random.normal(kbeta, (C,), dtype=jnp.float32)

    out = spatial_fusion_forward(x, conv_w, conv_b, gamma, beta)
    out = jax.block_until_ready(out)

    ref = spatial_fusion_reference(x, conv_w, conv_b, gamma, beta)
    ref = jax.block_until_ready(ref)

    assert out.shape == (N, C, H, W), out.shape
    assert jnp.allclose(out, ref, atol=1e-4, rtol=1e-4), float(
        jnp.max(jnp.abs(out - ref)))

    print("KERNEL_OK")
</pallas_src>

<mosaic_0001>
module attributes {stable_mosaic.version = 11 : i64} {
  func.func @probe_kernel(%arg0: memref<2x4x256xf32, #tpu.memory_space<vmem>>, %arg1: memref<2x4x256xf32, #tpu.memory_space<vmem>>, %arg2: memref<2x4x256xf32, #tpu.memory_space<vmem>>) attributes {dimension_semantics = [], scalar_prefetch = 0 : i64, scratch_operands = 0 : i64, tpu.core_type = #tpu.core_type<tc>} {
    %c0 = arith.constant 0 : index
    %c0_0 = arith.constant 0 : index
    %c0_1 = arith.constant 0 : index
    %0 = vector.load %arg0[%c0, %c0_0, %c0_1] : memref<2x4x256xf32, #tpu.memory_space<vmem>>, vector<2x4x256xf32>
    %c1_i32 = arith.constant 1 : i32
    %1 = tpu.dynamic_rotate %0 by %c1_i32 dim 2 : vector<2x4x256xf32>, i32 -> vector<2x4x256xf32>
    %c0_2 = arith.constant 0 : index
    %c0_3 = arith.constant 0 : index
    %c0_4 = arith.constant 0 : index
    %2 = vector.load %arg1[%c0_2, %c0_3, %c0_4] : memref<2x4x256xf32, #tpu.memory_space<vmem>>, vector<2x4x256xf32>
    tpu.vector_store %arg1[%c0_2, %c0_3, %c0_4], %1 {strides = array<i32>} : memref<2x4x256xf32, #tpu.memory_space<vmem>>, vector<2x4x256xf32>,
    %c0_5 = arith.constant 0 : index
    %c0_6 = arith.constant 0 : index
    %c0_7 = arith.constant 0 : index
    %3 = vector.load %arg0[%c0_5, %c0_6, %c0_7] : memref<2x4x256xf32, #tpu.memory_space<vmem>>, vector<2x4x256xf32>
    %c240_i32 = arith.constant 240 : i32
    %4 = tpu.dynamic_rotate %3 by %c240_i32 dim 2 : vector<2x4x256xf32>, i32 -> vector<2x4x256xf32>
    %c0_8 = arith.constant 0 : index
    %c0_9 = arith.constant 0 : index
    %c0_10 = arith.constant 0 : index
    %5 = vector.load %arg2[%c0_8, %c0_9, %c0_10] : memref<2x4x256xf32, #tpu.memory_space<vmem>>, vector<2x4x256xf32>
    tpu.vector_store %arg2[%c0_8, %c0_9, %c0_10], %4 {strides = array<i32>} : memref<2x4x256xf32, #tpu.memory_space<vmem>>, vector<2x4x256xf32>,
    return
  }
}

module attributes {stable_mosaic.version = 11 : i64} {
  func.func @_spatial_fusion_kernel(%arg0: i32, %arg1: memref<11x4x1xf32, #tpu.memory_space<vmem>>, %arg2: memref<4x1x256xf32, #tpu.memory_space<vmem>>, %arg3: memref<2x4x256xf32, #tpu.memory_space<vmem>>, %arg4: memref<2x4x256xf32, #tpu.memory_space<vmem>>, %arg5: memref<2x4x256xf32, #tpu.memory_space<vmem>>) attributes {dimension_semantics = [#tpu.dimension_semantics<parallel>], iteration_bounds = array<i64: 1>, scalar_prefetch = 0 : i64, scratch_operands = 1 : i64, tpu.core_type = #tpu.core_type<tc>, window_params = [{transform_indices = @transform_0, window_bounds = array<i64: 11, 4, 1>}, {pipeline_mode = #tpu.pipeline_mode<synchronous>, transform_indices = @transform_1, window_bounds = array<i64: 4, 1, 256>}, {transform_indices = @transform_2, window_bounds = array<i64: 2, 4, 256>}, {transform_indices = @transform_3, window_bounds = array<i64: 2, 4, 256>}]} {
    %c0 = arith.constant 0 : index
    %c0_0 = arith.constant 0 : index
    %c0_1 = arith.constant 0 : index
    %0 = vector.load %arg3[%c0, %c0_0, %c0_1] : memref<2x4x256xf32, #tpu.memory_space<vmem>>, vector<2x4x256xf32>
    %c0_2 = arith.constant 0 : index
    %c0_3 = arith.constant 0 : index
    %c0_4 = arith.constant 0 : index
    %1 = vector.load %arg1[%c0_2, %c0_3, %c0_4] : memref<11x4x1xf32, #tpu.memory_space<vmem>>, vector<11x4x1xf32>
    %c0_5 = arith.constant 0 : index
    %c0_6 = arith.constant 0 : index
    %c0_7 = arith.constant 0 : index
    %2 = vector.load %arg2[%c0_5, %c0_6, %c0_7] : memref<4x1x256xf32, #tpu.memory_space<vmem>>, vector<4x1x256xf32>
    %3 = vector.extract_strided_slice %0 {offsets = [0, 0, 240], sizes = [2, 4, 16], strides = [1, 1, 1]} : vector<2x4x256xf32> to vector<2x4x16xf32>
    %4 = vector.extract_strided_slice %0 {offsets = [0, 0, 0], sizes = [2, 4, 240], strides = [1, 1, 1]} : vector<2x4x256xf32> to vector<2x4x240xf32>
    %5 = tpu.concatenate %3, %4 in 2 : vector<2x4x16xf32>, vector<2x4x240xf32> -> vector<2x4x256xf32>
    %6 = vector.extract_strided_slice %2 {offsets = [2, 0, 0], sizes = [1, 1, 256], strides = [1, 1, 1]} : vector<4x1x256xf32> to vector<1x1x256xf32>
    %7 = vector.shape_cast %6 : vector<1x1x256xf32> to vector<1x256xf32>
    %8 = vector.shape_cast %7 : vector<1x256xf32> to vector<1x1x256xf32>
    %9 = vector.broadcast %8 : vector<1x1x256xf32> to vector<2x4x256xf32>
    %10 = arith.mulf %5, %9 : vector<2x4x256xf32>
    %11 = vector.extract_strided_slice %0 {offsets = [0, 0, 16], sizes = [2, 4, 240], strides = [1, 1, 1]} : vector<2x4x256xf32> to vector<2x4x240xf32>
    %12 = vector.extract_strided_slice %0 {offsets = [0, 0, 0], sizes = [2, 4, 16], strides = [1, 1, 1]} : vector<2x4x256xf32> to vector<2x4x16xf32>
    %13 = tpu.concatenate %11, %12 in 2 : vector<2x4x240xf32>, vector<2x4x16xf32> -> vector<2x4x256xf32>
    %14 = vector.extract_strided_slice %2 {offsets = [3, 0, 0], sizes = [1, 1, 256], strides = [1, 1, 1]} : vector<4x1x256xf32> to vector<1x1x256xf32>
    %15 = vector.shape_cast %14 : vector<1x1x256xf32> to vector<1x256xf32>
    %16 = vector.shape_cast %15 : vector<1x256xf32> to vector<1x1x256xf32>
    %17 = vector.broadcast %16 : vector<1x1x256xf32> to vector<2x4x256xf32>
    %18 = arith.mulf %13, %17 : vector<2x4x256xf32>
    %19 = vector.extract_strided_slice %1 {offsets = [1, 0, 0], sizes = [1, 4, 1], strides = [1, 1, 1]} : vector<11x4x1xf32> to vector<1x4x1xf32>
    %20 = vector.shape_cast %19 : vector<1x4x1xf32> to vector<4x1xf32>
    %21 = vector.shape_cast %20 : vector<4x1xf32> to vector<1x4x1xf32>
    %22 = vector.broadcast %21 : vector<1x4x1xf32> to vector<2x4x256xf32>
    %23 = arith.mulf %10, %22 : vector<2x4x256xf32>
    %24 = vector.extract_strided_slice %1 {offsets = [4, 0, 0], sizes = [1, 4, 1], strides = [1, 1, 1]} : vector<11x4x1xf32> to vector<1x4x1xf32>
    %25 = vector.shape_cast %24 : vector<1x4x1xf32> to vector<4x1xf32>
    %26 = vector.shape_cast %25 : vector<4x1xf32> to vector<1x4x1xf32>
    %27 = vector.broadcast %26 : vector<1x4x1xf32> to vector<2x4x256xf32>
    %28 = arith.mulf %0, %27 : vector<2x4x256xf32>
    %29 = arith.addf %23, %28 : vector<2x4x256xf32>
    %30 = vector.extract_strided_slice %1 {offsets = [7, 0, 0], sizes = [1, 4, 1], strides = [1, 1, 1]} : vector<11x4x1xf32> to vector<1x4x1xf32>
    %31 = vector.shape_cast %30 : vector<1x4x1xf32> to vector<4x1xf32>
    %32 = vector.shape_cast %31 : vector<4x1xf32> to vector<1x4x1xf32>
    %33 = vector.broadcast %32 : vector<1x4x1xf32> to vector<2x4x256xf32>
    %34 = arith.mulf %18, %33 : vector<2x4x256xf32>
    %35 = arith.addf %29, %34 : vector<2x4x256xf32>
    %36 = vector.extract_strided_slice %1 {offsets = [0, 0, 0], sizes = [1, 4, 1], strides = [1, 1, 1]} : vector<11x4x1xf32> to vector<1x4x1xf32>
    %37 = vector.shape_cast %36 : vector<1x4x1xf32> to vector<4x1xf32>
    %38 = vector.shape_cast %37 : vector<4x1xf32> to vector<1x4x1xf32>
    %39 = vector.broadcast %38 : vector<1x4x1xf32> to vector<2x4x256xf32>
    %40 = arith.mulf %10, %39 : vector<2x4x256xf32>
    %41 = vector.extract_strided_slice %1 {offsets = [3, 0, 0], sizes = [1, 4, 1], strides = [1, 1, 1]} : vector<11x4x1xf32> to vector<1x4x1xf32>
    %42 = vector.shape_cast %41 : vector<1x4x1xf32> to vector<4x1xf32>
    %43 = vector.shape_cast %42 : vector<4x1xf32> to vector<1x4x1xf32>
    %44 = vector.broadcast %43 : vector<1x4x1xf32> to vector<2x4x256xf32>
    %45 = arith.mulf %0, %44 : vector<2x4x256xf32>
    %46 = arith.addf %40, %45 : vector<2x4x256xf32>
    %47 = vector.extract_strided_slice %1 {offsets = [6, 0, 0], sizes = [1, 4, 1], strides = [1, 1, 1]} : vector<11x4x1xf32> to vector<1x4x1xf32>
    %48 = vector.shape_cast %47 : vector<1x4x1xf32> to vector<4x1xf32>
    %49 = vector.shape_cast %48 : vector<4x1xf32> to vector<1x4x1xf32>
    %50 = vector.broadcast %49 : vector<1x4x1xf32> to vector<2x4x256xf32>
    %51 = arith.mulf %18, %50 : vector<2x4x256xf32>
    %52 = arith.addf %46, %51 : vector<2x4x256xf32>
    %53 = vector.extract_strided_slice %1 {offsets = [2, 0, 0], sizes = [1, 4, 1], strides = [1, 1, 1]} : vector<11x4x1xf32> to vector<1x4x1xf32>
    %54 = vector.shape_cast %53 : vector<1x4x1xf32> to vector<4x1xf32>
    %55 = vector.shape_cast %54 : vector<4x1xf32> to vector<1x4x1xf32>
    %56 = vector.broadcast %55 : vector<1x4x1xf32> to vector<2x4x256xf32>
    %57 = arith.mulf %10, %56 : vector<2x4x256xf32>
    %58 = vector.extract_strided_slice %1 {offsets = [5, 0, 0], sizes = [1, 4, 1], strides = [1, 1, 1]} : vector<11x4x1xf32> to vector<1x4x1xf32>
    %59 = vector.shape_cast %58 : vector<1x4x1xf32> to vector<4x1xf32>
    %60 = vector.shape_cast %59 : vector<4x1xf32> to vector<1x4x1xf32>
    %61 = vector.broadcast %60 : vector<1x4x1xf32> to vector<2x4x256xf32>
    %62 = arith.mulf %0, %61 : vector<2x4x256xf32>
    %63 = arith.addf %57, %62 : vector<2x4x256xf32>
    %64 = vector.extract_strided_slice %1 {offsets = [8, 0, 0], sizes = [1, 4, 1], strides = [1, 1, 1]} : vector<11x4x1xf32> to vector<1x4x1xf32>
    %65 = vector.shape_cast %64 : vector<1x4x1xf32> to vector<4x1xf32>
    %66 = vector.shape_cast %65 : vector<4x1xf32> to vector<1x4x1xf32>
    %67 = vector.broadcast %66 : vector<1x4x1xf32> to vector<2x4x256xf32>
    %68 = arith.mulf %18, %67 : vector<2x4x256xf32>
    %69 = arith.addf %63, %68 : vector<2x4x256xf32>
    %70 = vector.extract_strided_slice %2 {offsets = [0, 0, 0], sizes = [1, 1, 256], strides = [1, 1, 1]} : vector<4x1x256xf32> to vector<1x1x256xf32>
    %71 = vector.shape_cast %70 : vector<1x1x256xf32> to vector<1x256xf32>
    %72 = vector.extract_strided_slice %52 {offsets = [0, 0, 255], sizes = [2, 4, 1], strides = [1, 1, 1]} : vector<2x4x256xf32> to vector<2x4x1xf32>
    %73 = vector.extract_strided_slice %52 {offsets = [0, 0, 0], sizes = [2, 4, 255], strides = [1, 1, 1]} : vector<2x4x256xf32> to vector<2x4x255xf32>
    %74 = tpu.concatenate %72, %73 in 2 : vector<2x4x1xf32>, vector<2x4x255xf32> -> vector<2x4x256xf32>
    %75 = vector.shape_cast %71 : vector<1x256xf32> to vector<1x1x256xf32>
    %76 = vector.broadcast %75 : vector<1x1x256xf32> to vector<2x4x256xf32>
    %77 = arith.mulf %76, %74 : vector<2x4x256xf32>
    %78 = arith.addf %35, %77 : vector<2x4x256xf32>
    %79 = vector.extract_strided_slice %2 {offsets = [1, 0, 0], sizes = [1, 1, 256], strides = [1, 1, 1]} : vector<4x1x256xf32> to vector<1x1x256xf32>
    %80 = vector.shape_cast %79 : vector<1x1x256xf32> to vector<1x256xf32>
    %81 = vector.extract_strided_slice %69 {offsets = [0, 0, 1], sizes = [2, 4, 255], strides = [1, 1, 1]} : vector<2x4x256xf32> to vector<2x4x255xf32>
    %82 = vector.extract_strided_slice %69 {offsets = [0, 0, 0], sizes = [2, 4, 1], strides = [1, 1, 1]} : vector<2x4x256xf32> to vector<2x4x1xf32>
    %83 = tpu.concatenate %81, %82 in 2 : vector<2x4x255xf32>, vector<2x4x1xf32> -> vector<2x4x256xf32>
    %84 = vector.shape_cast %80 : vector<1x256xf32> to vector<1x1x256xf32>
    %85 = vector.broadcast %84 : vector<1x1x256xf32> to vector<2x4x256xf32>
    %86 = arith.mulf %85, %83 : vector<2x4x256xf32>
    %87 = arith.addf %78, %86 : vector<2x4x256xf32>
    %c0_8 = arith.constant 0 : index
    %c0_9 = arith.constant 0 : index
    %c0_10 = arith.constant 0 : index
    %88 = vector.load %arg5[%c0_8, %c0_9, %c0_10] : memref<2x4x256xf32, #tpu.memory_space<vmem>>, vector<2x4x256xf32>
    tpu.vector_store %arg5[%c0_8, %c0_9, %c0_10], %87 {strides = array<i32>} : memref<2x4x256xf32, #tpu.memory_space<vmem>>, vector<2x4x256xf32>,
    %c0_11 = arith.constant 0 : index
    %c0_12 = arith.constant 0 : index
    %c0_13 = arith.constant 0 : index
    %89 = vector.load %arg5[%c0_11, %c0_12, %c0_13] : memref<2x4x256xf32, #tpu.memory_space<vmem>>, vector<2x4x256xf32>
    %cst = arith.constant dense<0.000000e+00> : vector<2x4xf32>
    %90 = vector.multi_reduction <add>, %89, %cst [2] : vector<2x4x256xf32> to vector<2x4xf32>
    %91 = vector.shape_cast %90 : vector<2x4xf32> to vector<2x4x1xf32>
    %cst_14 = arith.constant dense<0.000000e+00> : vector<4x1xf32>
    %92 = vector.multi_reduction <add>, %91, %cst_14 [0] : vector<2x4x1xf32> to vector<4x1xf32>
    %93 = vector.shape_cast %92 : vector<4x1xf32> to vector<1x4x1xf32>
    %94 = arith.mulf %89, %89 : vector<2x4x256xf32>
    %cst_15 = arith.constant dense<0.000000e+00> : vector<2x4xf32>
    %95 = vector.multi_reduction <add>, %94, %cst_15 [2] : vector<2x4x256xf32> to vector<2x4xf32>
    %96 = vector.shape_cast %95 : vector<2x4xf32> to vector<2x4x1xf32>
    %cst_16 = arith.constant dense<0.000000e+00> : vector<4x1xf32>
    %97 = vector.multi_reduction <add>, %96, %cst_16 [0] : vector<2x4x1xf32> to vector<4x1xf32>
    %98 = vector.shape_cast %97 : vector<4x1xf32> to vector<1x4x1xf32>
    %cst_17 = arith.constant 0.001953125 : f32
    %99 = vector.broadcast %cst_17 : f32 to vector<1x4x1xf32>
    %100 = arith.mulf %93, %99 : vector<1x4x1xf32>
    %cst_18 = arith.constant 0.001953125 : f32
    %101 = vector.broadcast %cst_18 : f32 to vector<1x4x1xf32>
    %102 = arith.mulf %98, %101 : vector<1x4x1xf32>
    %103 = arith.mulf %100, %100 : vector<1x4x1xf32>
    %104 = arith.subf %102, %103 : vector<1x4x1xf32>
    %cst_19 = arith.constant 0.000000e+00 : f32
    %105 = vector.broadcast %cst_19 : f32 to vector<1x4x1xf32>
    %106 = arith.maximumf %104, %105 : vector<1x4x1xf32>
    %cst_20 = arith.constant 9.99999974E-6 : f32
    %107 = vector.broadcast %cst_20 : f32 to vector<1x4x1xf32>
    %108 = arith.addf %106, %107 : vector<1x4x1xf32>
    %109 = math.rsqrt %108 : vector<1x4x1xf32>
    %110 = vector.extract_strided_slice %1 {offsets = [9, 0, 0], sizes = [1, 4, 1], strides = [1, 1, 1]} : vector<11x4x1xf32> to vector<1x4x1xf32>
    %111 = vector.shape_cast %110 : vector<1x4x1xf32> to vector<4x1xf32>
    %112 = vector.shape_cast %111 : vector<4x1xf32> to vector<1x4x1xf32>
    %113 = arith.mulf %112, %109 : vector<1x4x1xf32>
    %114 = vector.extract_strided_slice %1 {offsets = [10, 0, 0], sizes = [1, 4, 1], strides = [1, 1, 1]} : vector<11x4x1xf32> to vector<1x4x1xf32>
    %115 = vector.shape_cast %114 : vector<1x4x1xf32> to vector<4x1xf32>
    %116 = arith.mulf %100, %113 : vector<1x4x1xf32>
    %117 = vector.shape_cast %115 : vector<4x1xf32> to vector<1x4x1xf32>
    %118 = arith.subf %117, %116 : vector<1x4x1xf32>
    %c0_21 = arith.constant 0 : index
    %c0_22 = arith.constant 0 : index
    %c0_23 = arith.constant 0 : index
    %119 = vector.load %arg5[%c0_21, %c0_22, %c0_23] : memref<2x4x256xf32, #tpu.memory_space<vmem>>, vector<2x4x256xf32>
    %120 = vector.broadcast %113 : vector<1x4x1xf32> to vector<2x4x256xf32>
    %121 = arith.mulf %119, %120 : vector<2x4x256xf32>
    %122 = vector.broadcast %118 : vector<1x4x1xf32> to vector<2x4x256xf32>
    %123 = arith.addf %121, %122 : vector<2x4x256xf32>
    %cst_24 = arith.constant 5.000000e-01 : f32
    %124 = vector.broadcast %cst_24 : f32 to vector<2x4x256xf32>
    %125 = arith.mulf %124, %123 : vector<2x4x256xf32>
    %cst_25 = arith.constant 0.707106769 : f32
    %126 = vector.broadcast %cst_25 : f32 to vector<2x4x256xf32>
    %127 = arith.mulf %123, %126 : vector<2x4x256xf32>
    %128 = math.erf %127 : vector<2x4x256xf32>
    %cst_26 = arith.constant 1.000000e+00 : f32
    %129 = vector.broadcast %cst_26 : f32 to vector<2x4x256xf32>
    %130 = arith.addf %129, %128 : vector<2x4x256xf32>
    %131 = arith.mulf %125, %130 : vector<2x4x256xf32>
    %c0_27 = arith.constant 0 : index
    %c0_28 = arith.constant 0 : index
    %c0_29 = arith.constant 0 : index
    %132 = vector.load %arg4[%c0_27, %c0_28, %c0_29] : memref<2x4x256xf32, #tpu.memory_space<vmem>>, vector<2x4x256xf32>
    tpu.vector_store %arg4[%c0_27, %c0_28, %c0_29], %131 {strides = array<i32>} : memref<2x4x256xf32, #tpu.memory_space<vmem>>, vector<2x4x256xf32>,
    return
  }
  func.func @transform_0(%arg0: i32) -> (i32, i32, i32) {
    %c0_i32 = arith.constant 0 : i32
    %c0_i32_0 = arith.constant 0 : i32
    %c0_i32_1 = arith.constant 0 : i32
    return %c0_i32, %arg0, %c0_i32_0 : i32, i32, i32
  }
  func.func @transform_1(%arg0: i32) -> (i32, i32, i32) {
    %c0_i32 = arith.constant 0 : i32
    %c0_i32_0 = arith.constant 0 : i32
    %c0_i32_1 = arith.constant 0 : i32
    %c0_i32_2 = arith.constant 0 : i32
    return %c0_i32, %c0_i32_0, %c0_i32_1 : i32, i32, i32
  }
  func.func @transform_2(%arg0: i32) -> (i32, i32, i32) {
    %c0_i32 = arith.constant 0 : i32
    %c0_i32_0 = arith.constant 0 : i32
    %c0_i32_1 = arith.constant 0 : i32
    return %c0_i32, %arg0, %c0_i32_0 : i32, i32, i32
  }
  func.func @transform_3(%arg0: i32) -> (i32, i32, i32) {
    %c0_i32 = arith.constant 0 : i32
    %c0_i32_0 = arith.constant 0 : i32
    %c0_i32_1 = arith.constant 0 : i32
    return %c0_i32, %arg0, %c0_i32_0 : i32, i32, i32
  }
}

</mosaic_0001>

<llo_original>
// kernel: tpu_custom_call.1
$region0: #{tpu_custom_call.1}
  #allocation0 [shape = 'u32[]', space=smem, size = 0x4, offset = 0x4, fixed_abs, tag = 'smem constant byte address 0x4 - core index']
  #allocation1 [shape = 'u32[72,128]{1,0:T(1,128)}', space=vmem, size = 0x9000, scoped, tag = 'internal scratch']
  %s0 = inlined_call_operand.hbm [shape: f32[2,4,256], index: 0, kind: input, shape index: {}]
  %s1 = inlined_call_operand.hbm [shape: f32[2,4,256], index: 1, kind: output, shape index: {0}]
  %s2 = inlined_call_operand.hbm [shape: f32[2,4,256], index: 2, kind: output, shape index: {1}]
  %3 = xla_tuple %s1, %s2
  %s4 = sld [smem:[#allocation0]]
  $region26: #{tpu_custom_call.1} parent=0
    _
  %s6 = ssub.s32 1, %s4
  %s7 = scalar_select 0, %s6, %s4
  $region1: #{tpu_custom_call.1} parent=0
    #allocation2 [shape = 'u8[8192]{0}', space=vmem, size = 0x2000, scoped, tag = 'input window, operand 0, single buffered']
    #allocation3 [shape = 's32[1]{0}', space=sflag, size = 0x4, scoped, tag = 'scoped memory for tpu_custom_call.1']
    #allocation4 [shape = 's32[1]{0}', space=sflag, size = 0x4, scoped, tag = 'scoped memory for tpu_custom_call.1']
    #allocation5 [shape = 'u8[8192]{0}', space=vmem, size = 0x2000, scoped, tag = 'output window, operand 0, single buffered']
    #allocation6 [shape = 'u8[8192]{0}', space=vmem, size = 0x2000, scoped, tag = 'output window, operand 1, single buffered']
    #allocation7 [shape = 's32[1]{0}', space=sflag, size = 0x4, scoped, tag = 'scoped memory for tpu_custom_call.1']
    %8 = vsyncpa [#allocation3], 0
    %9 = vsyncpa [#allocation4], 0
    %10 = vsyncpa [#allocation7], 0
    // Predicated region
    $region2: #{tpu_custom_call.1} parent=1 // pred_check
      _
    $region3: #{tpu_custom_call.1} parent=1 // pred_check_branch
      %12 = sbr.rel (0) target = $region5
    $region4: #{tpu_custom_call.1} parent=1 // pred_region
      %14 = vsyncadd [#allocation3], 0
      %s15 = sshll.u32 %s0, 4
      %s16 = int_to_ptr.hbm [resolvable:$true] %s15
      %s17 = sshll.u32 [#allocation2], 4
      %s18 = int_to_ptr.vmem [resolvable:$true] %s17
      %23 = dma.hbm_to_vmem [thread:$0]  %s16, 256, %s18, [#allocation3], 128, 128, 8
    $region5: #{tpu_custom_call.1} parent=1 // pred_fallthru
      _
    // Predicated region
    $region6: #{tpu_custom_call.1} parent=1 // pred_check
      _
    $region7: #{tpu_custom_call.1} parent=1 // pred_check_branch
      %25 = sbr.rel (0) target = $region9
    $region8: #{tpu_custom_call.1} parent=1 // pred_region
      %27 = dma.done [#allocation3], 256
    $region9: #{tpu_custom_call.1} parent=1 // pred_fallthru
      _
    %v28 = vld [vmem:[#allocation2] sm:$0xff]
    %v29 = vld [vmem:[#allocation2 + $0x8] sm:$0xff]
    %32 = vst [vmem:[#allocation1] ss:$2 sm:$0xff] %v28
    %v33 = vld.sshfl [vmem:[#allocation1] sm:$0xff pattern:$0x75316420]
    %v34 = vld.sshfl [vmem:[#allocation1 + $0x8] sm:$0xff pattern:$0x75316420]
    %s35 = scalar_lea.vmem [#allocation1], 16
    %36 = vst [vmem:[%s35] ss:$2 sm:$0xff] %v29
    %v37 = vld.sshfl [vmem:[#allocation1 + $0x10] sm:$0xff pattern:$0x75316420]
    %v38 = vld.sshfl [vmem:[#allocation1 + $0x18] sm:$0xff pattern:$0x75316420]
    %43 = vrot.lane.b32.xlu0 %v33, 1
    %v44 = vpop.permute.xlu0 %43
    %45 = vrot.lane.b32.xlu0 %v37, 1
    %v46 = vpop.permute.xlu0 %45
    %47 = vrot.lane.b32.xlu0 %v34, 1
    %v48 = vpop.permute.xlu0 %47
    %49 = vrot.lane.b32.xlu0 %v38, 1
    %v50 = vpop.permute.xlu0 %49
    %v51 = vlaneseq
    %v52 = vand.u32 %v51, 127
    %vm53 = vcmp.lt.s32.totalorder %v52, 1
    %v54 = vsel %vm53, %v44, %v48
    %v55 = vsel %vm53, %v46, %v50
    %v56 = vsel %vm53, %v48, %v44
    %v57 = vsel %vm53, %v50, %v46
    %v62 = vrot.slane %v54, 4
    %v63 = vrot.slane %v55, 4
    %vm64 = vcmask 1043456
    %v65 = vsel %vm64, %v56, %v62
    %v66 = vsel %vm64, %v57, %v63
    %69 = vst [vmem:[#allocation5] sm:$0xff] %v65
    %70 = vst [vmem:[#allocation5 + $0x8] sm:$0xff] %v66
    %v71 = vld [vmem:[#allocation2] sm:$0xff]
    %v72 = vld [vmem:[#allocation2 + $0x8] sm:$0xff]
    %75 = vst [vmem:[#allocation1] ss:$2 sm:$0xff] %v71
    %v76 = vld.sshfl [vmem:[#allocation1] sm:$0xff pattern:$0x75316420]
    %v77 = vld.sshfl [vmem:[#allocation1 + $0x8] sm:$0xff pattern:$0x75316420]
    %s78 = scalar_lea.vmem [#allocation1], 16
    %79 = vst [vmem:[%s78] ss:$2 sm:$0xff] %v72
    %v80 = vld.sshfl [vmem:[#allocation1 + $0x10] sm:$0xff pattern:$0x75316420]
    %v81 = vld.sshfl [vmem:[#allocation1 + $0x18] sm:$0xff pattern:$0x75316420]
    %86 = vrot.lane.b32.xlu0 %v76, 112
    %v87 = vpop.permute.xlu0 %86
    %88 = vrot.lane.b32.xlu0 %v80, 112
    %v89 = vpop.permute.xlu0 %88
    %90 = vrot.lane.b32.xlu0 %v77, 112
    %v91 = vpop.permute.xlu0 %90
    %92 = vrot.lane.b32.xlu0 %v81, 112
    %v93 = vpop.permute.xlu0 %92
    %vm94 = vcmp.lt.s32.totalorder %v52, 112
    %v95 = vsel %vm94, %v87, %v91
    %v96 = vsel %vm94, %v89, %v93
    %v97 = vsel %vm94, %v91, %v87
    %v98 = vsel %vm94, %v93, %v89
    %v103 = vrot.slane %v97, 4
    %v104 = vrot.slane %v98, 4
    %v105 = vsel %vm64, %v95, %v103
    %v106 = vsel %vm64, %v96, %v104
    %109 = vst [vmem:[#allocation6] sm:$0xff] %v105
    %110 = vst [vmem:[#allocation6 + $0x8] sm:$0xff] %v106
    // Predicated region
    $region10: #{tpu_custom_call.1} parent=1 // pred_check
      _
    $region11: #{tpu_custom_call.1} parent=1 // pred_check_branch
      %112 = sbr.rel (0) target = $region13
    $region12: #{tpu_custom_call.1} parent=1 // pred_region
      %114 = vsyncadd [#allocation4], 0
      %s115 = sshll.u32 [#allocation5], 4
      %s116 = int_to_ptr.vmem [resolvable:$true] %s115
      %s117 = sshll.u32 %s1, 4
      %s118 = int_to_ptr.hbm [resolvable:$true] %s117
      %123 = dma.vmem_to_hbm [thread:$0]  %s116, 256, %s118, [#allocation4], 128, 128, 8
    $region13: #{tpu_custom_call.1} parent=1 // pred_fallthru
      _
    // Predicated region
    $region14: #{tpu_custom_call.1} parent=1 // pred_check
      _
    $region15: #{tpu_custom_call.1} parent=1 // pred_check_branch
      %125 = sbr.rel (0) target = $region17
    $region16: #{tpu_custom_call.1} parent=1 // pred_region
      %127 = vsyncadd [#allocation7], 0
      %s128 = sshll.u32 [#allocation6], 4
      %s129 = int_to_ptr.vmem [resolvable:$true] %s128
      %s130 = sshll.u32 %s2, 4
      %s131 = int_to_ptr.hbm [resolvable:$true] %s130
      %136 = dma.vmem_to_hbm [thread:$0]  %s129, 256, %s131, [#allocation7], 128, 128, 8
    $region17: #{tpu_custom_call.1} parent=1 // pred_fallthru
      _
    // Predicated region
    $region18: #{tpu_custom_call.1} parent=1 // pred_check
      _
    $region19: #{tpu_custom_call.1} parent=1 // pred_check_branch
      %138 = sbr.rel (0) target = $region21
    $region20: #{tpu_custom_call.1} parent=1 // pred_region
      %140 = dma.done [#allocation4], 256
    $region21: #{tpu_custom_call.1} parent=1 // pred_fallthru
      _
    // Predicated region
    $region22: #{tpu_custom_call.1} parent=1 // pred_check
      _
    $region23: #{tpu_custom_call.1} parent=1 // pred_check_branch
      %142 = sbr.rel (0) target = $region25
    $region24: #{tpu_custom_call.1} parent=1 // pred_region
      %144 = dma.done [#allocation7], 256
    $region25: #{tpu_custom_call.1} parent=1 // pred_fallthru
      _
    %145 = vsyncpa [#allocation3], 1
    %146 = vsyncpa [#allocation4], 1
    %147 = vsyncpa [#allocation7], 1

// kernel: _forward_impl.1
$region0: #{_forward_impl.1}
  #allocation0 [shape = 'u32[]', space=smem, size = 0x4, offset = 0x4, fixed_abs, tag = 'smem constant byte address 0x4 - core index']
  #allocation1 [shape = 'u32[72,128]{1,0:T(1,128)}', space=vmem, size = 0x9000, scoped, tag = 'internal scratch']
  #allocation2 [shape = 'f32[2,4,256]{2,1,0:T(4,128)}', space=vmem, size = 0x2000, scoped, tag = 'scratch operand']
  %s0 = inlined_call_operand.vmem [shape: f32[11,4,1], index: 0, kind: input, shape index: {}]
  %s1 = inlined_call_operand.vmem [shape: f32[4,1,256], index: 1, kind: input, shape index: {}]
  %s2 = inlined_call_operand.vmem [shape: f32[2,4,256], index: 2, kind: input, shape index: {}]
  %s3 = inlined_call_operand.vmem [shape: f32[2,4,256], index: 3, kind: output, shape index: {}]
  %s4 = sld [smem:[#allocation0]]
  $region22: #{_forward_impl.1} parent=0
    _
  %s6 = ssub.s32 1, %s4
  %s7 = scalar_select 0, %s6, %s4
  // Predicated region
  $region2: #{_forward_impl.1} parent=0 // pred_check
    _
  $region3: #{_forward_impl.1} parent=0 // pred_check_branch
    %9 = sbr.rel (0) target = $region5
  $region4: #{_forward_impl.1} parent=0 // pred_region
    _
  $region5: #{_forward_impl.1} parent=0 // pred_fallthru
    _
  // Predicated region
  $region6: #{_forward_impl.1} parent=0 // pred_check
    _
  $region7: #{_forward_impl.1} parent=0 // pred_check_branch
    %11 = sbr.rel (0) target = $region9
  $region8: #{_forward_impl.1} parent=0 // pred_region
    _
  $region9: #{_forward_impl.1} parent=0 // pred_fallthru
    _
  // Predicated region
  $region10: #{_forward_impl.1} parent=0 // pred_check
    _
  $region11: #{_forward_impl.1} parent=0 // pred_check_branch
    %13 = sbr.rel (0) target = $region13
  $region12: #{_forward_impl.1} parent=0 // pred_region
    _
  $region13: #{_forward_impl.1} parent=0 // pred_fallthru
    _
  %v14 = vld [vmem:[%s2] sm:$0xff]
  %v15 = vld [vmem:[%s2 + $0x8] sm:$0xff]
  %v16 = vld [vmem:[%s0] sm:$0xf]
  %v17 = vld [vmem:[%s0 + $0x4] sm:$0xf]
  %v18 = vld [vmem:[%s0 + $0x8] sm:$0xf]
  %v19 = vld [vmem:[%s0 + $0xc] sm:$0xf]
  %v20 = vld [vmem:[%s0 + $0x10] sm:$0xf]
  %v21 = vld [vmem:[%s0 + $0x14] sm:$0xf]
  %v22 = vld [vmem:[%s0 + $0x18] sm:$0xf]
  %v23 = vld [vmem:[%s0 + $0x1c] sm:$0xf]
  %v24 = vld [vmem:[%s0 + $0x20] sm:$0xf]
  %v25 = vld [vmem:[%s0 + $0x24] sm:$0xf]
  %v26 = vld [vmem:[%s0 + $0x28] sm:$0xf]
  %v27 = vld [vmem:[%s1] sm:$0x3]
  %v28 = vld [vmem:[%s1 + $0x2] sm:$0x3]
  %v29 = vld [vmem:[%s1 + $0x4] sm:$0x3]
  %v30 = vld [vmem:[%s1 + $0x6] sm:$0x3]
  %33 = vst [vmem:[#allocation1] ss:$2 sm:$0xff] %v14
  %v34 = vld.sshfl [vmem:[#allocation1 + $0x8] sm:$0xff pattern:$0x75316420]
  %s35 = scalar_lea.vmem [#allocation1], 16
  %36 = vst [vmem:[%s35] ss:$2 sm:$0xff] %v15
  %v37 = vld.sshfl [vmem:[#allocation1 + $0x18] sm:$0xff pattern:$0x75316420]
  %38 = vrot.lane.b32.xlu0 %v34, 16
  %v39 = vpop.permute.xlu0 %38
  %40 = vrot.lane.b32.xlu0 %v37, 16
  %v41 = vpop.permute.xlu0 %40
  %44 = vst [vmem:[#allocation1] ss:$2 sm:$0xff] %v14
  %v45 = vld.sshfl [vmem:[#allocation1] sm:$0xff pattern:$0x75316420]
  %v46 = vld.sshfl [vmem:[#allocation1 + $0x8] sm:$0xff pattern:$0x75316420]
  %s47 = scalar_lea.vmem [#allocation1], 16
  %48 = vst [vmem:[%s47] ss:$2 sm:$0xff] %v15
  %v49 = vld.sshfl [vmem:[#allocation1 + $0x10] sm:$0xff pattern:$0x75316420]
  %v50 = vld.sshfl [vmem:[#allocation1 + $0x18] sm:$0xff pattern:$0x75316420]
  %51 = vrot.lane.b32.xlu0 %v45, 16
  %v52 = vpop.permute.xlu0 %51
  %53 = vrot.lane.b32.xlu0 %v46, 16
  %v54 = vpop.permute.xlu0 %53
  %55 = vrot.lane.b32.xlu0 %v49, 16
  %v56 = vpop.permute.xlu0 %55
  %57 = vrot.lane.b32.xlu0 %v50, 16
  %v58 = vpop.permute.xlu0 %57
  %vm59 = vcmask 130048
  %v60 = vsel %vm59, %v52, %v54
  %v61 = vsel %vm59, %v56, %v58
  %v66 = vsel %vm59, %v39, %v52
  %v67 = vsel %vm59, %v41, %v56
  %v69 = vperm.slane %v29, 0
  %v70 = vperm.slane %v29, 1
  %v73 = vmul.f32 %v66, %v69
  %v74 = vmul.f32 %v60, %v70
  %v75 = vmul.f32 %v67, %v69
  %v76 = vmul.f32 %v61, %v70
  %77 = vst [vmem:[#allocation1] ss:$2 sm:$0xff] %v14
  %v78 = vld.sshfl [vmem:[#allocation1] sm:$0xff pattern:$0x75316420]
  %v79 = vld.sshfl [vmem:[#allocation1 + $0x8] sm:$0xff pattern:$0x75316420]
  %s80 = scalar_lea.vmem [#allocation1], 16
  %81 = vst [vmem:[%s80] ss:$2 sm:$0xff] %v15
  %v82 = vld.sshfl [vmem:[#allocation1 + $0x10] sm:$0xff pattern:$0x75316420]
  %v83 = vld.sshfl [vmem:[#allocation1 + $0x18] sm:$0xff pattern:$0x75316420]
  %84 = vrot.lane.b32.xlu0 %v78, 112
  %v85 = vpop.permute.xlu0 %84
  %86 = vrot.lane.b32.xlu0 %v79, 112
  %v87 = vpop.permute.xlu0 %86
  %88 = vrot.lane.b32.xlu0 %v82, 112
  %v89 = vpop.permute.xlu0 %88
  %90 = vrot.lane.b32.xlu0 %v83, 112
  %v91 = vpop.permute.xlu0 %90
  %vm92 = vcmask 916480
  %v93 = vsel %vm92, %v85, %v87
  %v94 = vsel %vm92, %v89, %v91
  %99 = vst [vmem:[#allocation1] ss:$2 sm:$0xff] %v14
  %v100 = vld.sshfl [vmem:[#allocation1] sm:$0xff pattern:$0x75316420]
  %s101 = scalar_lea.vmem [#allocation1], 16
  %102 = vst [vmem:[%s101] ss:$2 sm:$0xff] %v15
  %v103 = vld.sshfl [vmem:[#allocation1 + $0x10] sm:$0xff pattern:$0x75316420]
  %104 = vrot.lane.b32.xlu0 %v100, 112
  %v105 = vpop.permute.xlu0 %104
  %106 = vrot.lane.b32.xlu0 %v103, 112
  %v107 = vpop.permute.xlu0 %106
  %v110 = vsel %vm92, %v87, %v105
  %v111 = vsel %vm92, %v91, %v107
  %v113 = vperm.slane %v30, 0
  %v114 = vperm.slane %v30, 1
  %v117 = vmul.f32 %v93, %v113
  %v118 = vmul.f32 %v110, %v114
  %v119 = vmul.f32 %v94, %v113
  %v120 = vmul.f32 %v111, %v114
  %122 = vset.pattern.permute.xlu0 0
  %123 = vperm.xlu0 %122, %v17
  %v124 = vpop.permute.xlu0 %123
  %v126 = vmul.f32 %v73, %v124
  %v127 = vmul.f32 %v74, %v124
  %v128 = vmul.f32 %v75, %v124
  %v129 = vmul.f32 %v76, %v124
  %131 = vset.pattern.permute.xlu0 0
  %132 = vperm.xlu0 %131, %v20
  %v133 = vpop.permute.xlu0 %132
  %v135 = vunpack.c.l.s4 839922192
  %v136 = vunpack.c.0.s8 %v135
  %v137 = vperm.slane %v133, %v136
  %v139 = vmul.f32 %v14, %v137
  %v140 = vmul.f32 %v15, %v137
  %143 = vst [vmem:[#allocation1] ss:$2 sm:$0xff] %v139
  %v144 = vld.sshfl [vmem:[#allocation1] sm:$0xff pattern:$0x75316420]
  %v145 = vld.sshfl [vmem:[#allocation1 + $0x8] sm:$0xff pattern:$0x75316420]
  %s146 = scalar_lea.vmem [#allocation1], 16
  %147 = vst [vmem:[%s146] ss:$2 sm:$0xff] %v140
  %v148 = vld.sshfl [vmem:[#allocation1 + $0x10] sm:$0xff pattern:$0x75316420]
  %v149 = vld.sshfl [vmem:[#allocation1 + $0x18] sm:$0xff pattern:$0x75316420]
  %v154 = vadd.f32 %v126, %v144
  %v155 = vadd.f32 %v127, %v145
  %v156 = vadd.f32 %v128, %v148
  %v157 = vadd.f32 %v129, %v149
  %159 = vset.pattern.permute.xlu0 0
  %160 = vperm.xlu0 %159, %v23
  %v161 = vpop.permute.xlu0 %160
  %v163 = vmul.f32 %v117, %v161
  %v164 = vmul.f32 %v118, %v161
  %v165 = vmul.f32 %v119, %v161
  %v166 = vmul.f32 %v120, %v161
  %v167 = vadd.f32 %v154, %v163
  %v168 = vadd.f32 %v155, %v164
  %v169 = vadd.f32 %v156, %v165
  %v170 = vadd.f32 %v157, %v166
  %172 = vset.pattern.permute.xlu0 0
  %173 = vperm.xlu0 %172, %v16
  %v174 = vpop.permute.xlu0 %173
  %v176 = vmul.f32 %v73, %v174
  %v177 = vmul.f32 %v74, %v174
  %v178 = vmul.f32 %v75, %v174
  %v179 = vmul.f32 %v76, %v174
  %181 = vset.pattern.permute.xlu0 0
  %182 = vperm.xlu0 %181, %v19
  %v183 = vpop.permute.xlu0 %182
  %v185 = vunpack.c.l.s4 839922192
  %v186 = vunpack.c.0.s8 %v185
  %v187 = vperm.slane %v183, %v186
  %v189 = vmul.f32 %v14, %v187
  %v190 = vmul.f32 %v15, %v187
  %193 = vst [vmem:[#allocation1] ss:$2 sm:$0xff] %v189
  %v194 = vld.sshfl [vmem:[#allocation1] sm:$0xff pattern:$0x75316420]
  %v195 = vld.sshfl [vmem:[#allocation1 + $0x8] sm:$0xff pattern:$0x75316420]
  %s196 = scalar_lea.vmem [#allocation1], 16
  %197 = vst [vmem:[%s196] ss:$2 sm:$0xff] %v190
  %v198 = vld.sshfl [vmem:[#allocation1 + $0x10] sm:$0xff pattern:$0x75316420]
  %v199 = vld.sshfl [vmem:[#allocation1 + $0x18] sm:$0xff pattern:$0x75316420]
  %v204 = vadd.f32 %v176, %v194
  %v205 = vadd.f32 %v177, %v195
  %v206 = vadd.f32 %v178, %v198
  %v207 = vadd.f32 %v179, %v199
  %209 = vset.pattern.permute.xlu0 0
  %210 = vperm.xlu0 %209, %v22
  %v211 = vpop.permute.xlu0 %210
  %v213 = vmul.f32 %v117, %v211
  %v214 = vmul.f32 %v118, %v211
  %v215 = vmul.f32 %v119, %v211
  %v216 = vmul.f32 %v120, %v211
  %v217 = vadd.f32 %v204, %v213
  %v218 = vadd.f32 %v205, %v214
  %v219 = vadd.f32 %v206, %v215
  %v220 = vadd.f32 %v207, %v216
  %222 = vset.pattern.permute.xlu0 0
  %223 = vperm.xlu0 %222, %v18
  %v224 = vpop.permute.xlu0 %223
  %v226 = vmul.f32 %v73, %v224
  %v227 = vmul.f32 %v74, %v224
  %v228 = vmul.f32 %v75, %v224
  %v229 = vmul.f32 %v76, %v224
  %231 = vset.pattern.permute.xlu0 0
  %232 = vperm.xlu0 %231, %v21
  %v233 = vpop.permute.xlu0 %232
  %v235 = vunpack.c.l.s4 839922192
  %v236 = vunpack.c.0.s8 %v235
  %v237 = vperm.slane %v233, %v236
  %v239 = vmul.f32 %v14, %v237
  %v240 = vmul.f32 %v15, %v237
  %243 = vst [vmem:[#allocation1] ss:$2 sm:$0xff] %v239
  %v244 = vld.sshfl [vmem:[#allocation1] sm:$0xff pattern:$0x75316420]
  %v245 = vld.sshfl [vmem:[#allocation1 + $0x8] sm:$0xff pattern:$0x75316420]
  %s246 = scalar_lea.vmem [#allocation1], 16
  %247 = vst [vmem:[%s246] ss:$2 sm:$0xff] %v240
  %v248 = vld.sshfl [vmem:[#allocation1 + $0x10] sm:$0xff pattern:$0x75316420]
  %v249 = vld.sshfl [vmem:[#allocation1 + $0x18] sm:$0xff pattern:$0x75316420]
  %v254 = vadd.f32 %v226, %v244
  %v255 = vadd.f32 %v227, %v245
  %v256 = vadd.f32 %v228, %v248
  %v257 = vadd.f32 %v229, %v249
  %259 = vset.pattern.permute.xlu0 0
  %260 = vperm.xlu0 %259, %v24
  %v261 = vpop.permute.xlu0 %260
  %v263 = vmul.f32 %v117, %v261
  %v264 = vmul.f32 %v118, %v261
  %v265 = vmul.f32 %v119, %v261
  %v266 = vmul.f32 %v120, %v261
  %v267 = vadd.f32 %v254, %v263
  %v268 = vadd.f32 %v255, %v264
  %v269 = vadd.f32 %v256, %v265
  %v270 = vadd.f32 %v257, %v266
  %273 = vrot.lane.b32.xlu0 %v218, 1
  %v274 = vpop.permute.xlu0 %273
  %275 = vrot.lane.b32.xlu0 %v220, 1
  %v276 = vpop.permute.xlu0 %275
  %281 = vrot.lane.b32.xlu0 %v217, 1
  %v282 = vpop.permute.xlu0 %281
  %283 = vrot.lane.b32.xlu0 %v219, 1
  %v284 = vpop.permute.xlu0 %283
  %vm285 = vcmask 7168
  %v286 = vsel %vm285, %v282, %v274
  %v287 = vsel %vm285, %v284, %v276
  %v292 = vsel %vm285, %v274, %v282
  %v293 = vsel %vm285, %v276, %v284
  %v295 = vperm.slane %v27, 0
  %v296 = vperm.slane %v27, 1
  %v299 = vmul.f32 %v295, %v292
  %v300 = vmul.f32 %v296, %v286
  %v301 = vmul.f32 %v295, %v293
  %v302 = vmul.f32 %v296, %v287
  %v303 = vadd.f32 %v167, %v299
  %v304 = vadd.f32 %v168, %v300
  %v305 = vadd.f32 %v169, %v301
  %v306 = vadd.f32 %v170, %v302
  %311 = vrot.lane.b32.xlu0 %v267, 127
  %v312 = vpop.permute.xlu0 %311
  %313 = vrot.lane.b32.xlu0 %v268, 127
  %v314 = vpop.permute.xlu0 %313
  %315 = vrot.lane.b32.xlu0 %v269, 127
  %v316 = vpop.permute.xlu0 %315
  %317 = vrot.lane.b32.xlu0 %v270, 127
  %v318 = vpop.permute.xlu0 %317
  %vm319 = vcmask 1039360
  %v320 = vsel %vm319, %v312, %v314
  %v321 = vsel %vm319, %v316, %v318
  %v328 = vsel %vm319, %v314, %v312
  %v329 = vsel %vm319, %v318, %v316
  %v331 = vperm.slane %v28, 0
  %v332 = vperm.slane %v28, 1
  %v335 = vmul.f32 %v331, %v320
  %v336 = vmul.f32 %v332, %v328
  %v337 = vmul.f32 %v331, %v321
  %v338 = vmul.f32 %v332, %v329
  %v339 = vadd.f32 %v303, %v335
  %v340 = vadd.f32 %v304, %v336
  %v341 = vadd.f32 %v305, %v337
  %v342 = vadd.f32 %v306, %v338
  %v347 = vrot.slane %v340, 4
  %v348 = vrot.slane %v342, 4
  %vm349 = vcmask 1043456
  %v350 = vsel %vm349, %v339, %v347
  %v351 = vsel %vm349, %v341, %v348
  %354 = vst [vmem:[#allocation2] sm:$0xff] %v350
  %355 = vst [vmem:[#allocation2 + $0x8] sm:$0xff] %v351
  %v356 = vld [vmem:[#allocation2] sm:$0xff]
  %v357 = vld [vmem:[#allocation2 + $0x8] sm:$0xff]
  %360 = vst [vmem:[#allocation1] ss:$2 sm:$0xff] %v356
  %v361 = vld.sshfl [vmem:[#allocation1] sm:$0xff pattern:$0x75316420]
  %v362 = vld.sshfl [vmem:[#allocation1 + $0x8] sm:$0xff pattern:$0x75316420]
  %s363 = scalar_lea.vmem [#allocation1], 16
  %364 = vst [vmem:[%s363] ss:$2 sm:$0xff] %v357
  %v365 = vld.sshfl [vmem:[#allocation1 + $0x10] sm:$0xff pattern:$0x75316420]
  %v366 = vld.sshfl [vmem:[#allocation1 + $0x18] sm:$0xff pattern:$0x75316420]
  %v371 = vsel %vm349, %v361, 0.0
  %v372 = vsel %vm349, %v362, 0.0
  %v373 = vadd.f32 %v371, %v372
  %374 = vadd.xlane.f32.xlu0 %v373
  %v375 = vpop.xlane.xlu0 %374
  %v376 = vsel %vm349, %v365, 0.0
  %v377 = vsel %vm349, %v366, 0.0
  %v378 = vadd.f32 %v376, %v377
  %379 = vadd.xlane.f32.xlu0 %v378
  %v380 = vpop.xlane.xlu0 %379
  %v381 = vsel %vm349, %v375, 0.0
  %v382 = vsel %vm349, %v380, 0.0
  %v383 = vadd.f32 %v381, %v382
  %v384 = vmul.f32 %v356, %v356
  %v385 = vmul.f32 %v357, %v357
  %388 = vst [vmem:[#allocation1] ss:$2 sm:$0xff] %v384
  %v389 = vld.sshfl [vmem:[#allocation1] sm:$0xff pattern:$0x75316420]
  %v390 = vld.sshfl [vmem:[#allocation1 + $0x8] sm:$0xff pattern:$0x75316420]
  %s391 = scalar_lea.vmem [#allocation1], 16
  %392 = vst [vmem:[%s391] ss:$2 sm:$0xff] %v385
  %v393 = vld.sshfl [vmem:[#allocation1 + $0x10] sm:$0xff pattern:$0x75316420]
  %v394 = vld.sshfl [vmem:[#allocation1 + $0x18] sm:$0xff pattern:$0x75316420]
  %v399 = vsel %vm349, %v389, 0.0
  %v400 = vsel %vm349, %v390, 0.0
  %v401 = vadd.f32 %v399, %v400
  %402 = vadd.xlane.f32.xlu0 %v401
  %v403 = vpop.xlane.xlu0 %402
  %v404 = vsel %vm349, %v393, 0.0
  %v405 = vsel %vm349, %v394, 0.0
  %v406 = vadd.f32 %v404, %v405
  %407 = vadd.xlane.f32.xlu0 %v406
  %v408 = vpop.xlane.xlu0 %407
  %v409 = vsel %vm349, %v403, 0.0
  %v410 = vsel %vm349, %v408, 0.0
  %v411 = vadd.f32 %v409, %v410
  %v412 = vmul.f32 %v383, 0.001953125
  %v413 = vmul.f32 %v411, 0.001953125
  %v414 = vmul.f32 %v412, %v412
  %v415 = vsub.f32 %v413, %v414
  %v416 = vmax.f32 %v415, 0.0
  %v417 = vadd.f32 %v416, 1e-05
  %v418 = vrsqrt.pop %v417
  %v419 = vmul.f32 %v418, %v417
  %v420 = vmul.f32 %v419, %v418
  %v421 = vmul.f32 0.5, %v420
  %v422 = vsub.f32 1.5, %v421
  %v423 = vmul.f32 %v418, %v422
  %vm424 = vweird.f32 %v417
  %vm425 = vweird.f32 %v418
  %vm426 = vmor %vm424, %vm425
  %v427 = vsel %vm426, %v418, %v423
  %v428 = vmul.f32 %v25, %v427
  %v429 = vmul.f32 %v412, %v428
  %v430 = vsub.f32 %v26, %v429
  %432 = vset.pattern.permute.xlu0 0
  %433 = vperm.xlu0 %432, %v428
  %v434 = vpop.permute.xlu0 %433
  %v436 = vunpack.c.l.s4 839922192
  %v437 = vunpack.c.0.s8 %v436
  %v438 = vperm.slane %v434, %v437
  %v440 = vmul.f32 %v356, %v438
  %v441 = vmul.f32 %v357, %v438
  %443 = vset.pattern.permute.xlu0 0
  %444 = vperm.xlu0 %443, %v430
  %v445 = vpop.permute.xlu0 %444
  %v447 = vunpack.c.l.s4 839922192
  %v448 = vunpack.c.0.s8 %v447
  %v449 = vperm.slane %v445, %v448
  %v451 = vadd.f32 %v440, %v449
  %v452 = vadd.f32 %v441, %v449
  %v453 = vmul.f32 %v451, 0.5
  %v454 = vmul.f32 %v452, 0.5
  %v455 = vmul.f32 %v451, 0.70710677
  %v456 = vmul.f32 %v452, 0.70710677
  %v457 = vmul.f32 %v455, %v455
  %v458 = vmin.f32 16.0, %v457
  %v459 = vmul.f32 %v458, 2.1237322e-06
  %v460 = vadd.f32 %v459, 0.00028619796
  %v461 = vmul.f32 %v458, %v460
  %v462 = vadd.f32 %v461, 0.0036580483
  %v463 = vmul.f32 %v458, %v462
  %v464 = vadd.f32 %v463, 0.05243302
  %v465 = vmul.f32 %v458, %v464
  %v466 = vadd.f32 %v465, 0.18741608
  %v467 = vmul.f32 %v458, %v466
  %v468 = vadd.f32 %v467, 1.1283791
  %v469 = vmul.f32 %v455, %v468
  %v470 = vmul.f32 %v458, 3.8918573e-05
  %v471 = vadd.f32 %v470, 0.001143296
  %v472 = vmul.f32 %v458, %v471
  %v473 = vadd.f32 %v472, 0.014752088
  %v474 = vmul.f32 %v458, %v473
  %v475 = vadd.f32 %v474, 0.112945676
  %v476 = vmul.f32 %v458, %v475
  %v477 = vadd.f32 %v476, 0.4994258
  %v478 = vmul.f32 %v458, %v477
  %v479 = vadd.f32 %v478, 1.0
  %v480 = vrcp.pop %v479
  %v481 = vmul.f32 %v479, %v480
  %v482 = vsub.f32 1.0, %v481
  %v483 = vmul.f32 %v480, %v482
  %v484 = vadd.f32 %v480, %v483
  %vm485 = vweird.f32 %v479
  %vm486 = vweird.f32 %v480
  %vm487 = vmor %vm485, %vm486
  %v488 = vsel %vm487, %v480, %v484
  %v489 = vand.u32 2147483647, %v479
  %vm490 = vcmp.eq.f32.partialorder %v489, 8.507059e+37
  %v491 = vand.u32 %v479, 2147483648
  %v492 = vor.u32 1.1754944e-38, %v491
  %v493 = vsel %vm490, %v492, %v488
  %v494 = vmul.f32 %v469, %v493
  %v495 = vmin.f32 %v494, 1.0
  %v496 = vmax.f32 %v495, -1.0
  %v497 = vmul.f32 %v456, %v456
  %v498 = vmin.f32 16.0, %v497
  %v499 = vmul.f32 %v498, 2.1237322e-06
  %v500 = vadd.f32 %v499, 0.00028619796
  %v501 = vmul.f32 %v498, %v500
  %v502 = vadd.f32 %v501, 0.0036580483
  %v503 = vmul.f32 %v498, %v502
  %v504 = vadd.f32 %v503, 0.05243302
  %v505 = vmul.f32 %v498, %v504
  %v506 = vadd.f32 %v505, 0.18741608
  %v507 = vmul.f32 %v498, %v506
  %v508 = vadd.f32 %v507, 1.1283791
  %v509 = vmul.f32 %v456, %v508
  %v510 = vmul.f32 %v498, 3.8918573e-05
  %v511 = vadd.f32 %v510, 0.001143296
  %v512 = vmul.f32 %v498, %v511
  %v513 = vadd.f32 %v512, 0.014752088
  %v514 = vmul.f32 %v498, %v513
  %v515 = vadd.f32 %v514, 0.112945676
  %v516 = vmul.f32 %v498, %v515
  %v517 = vadd.f32 %v516, 0.4994258
  %v518 = vmul.f32 %v498, %v517
  %v519 = vadd.f32 %v518, 1.0
  %v520 = vrcp.pop %v519
  %v521 = vmul.f32 %v519, %v520
  %v522 = vsub.f32 1.0, %v521
  %v523 = vmul.f32 %v520, %v522
  %v524 = vadd.f32 %v520, %v523
  %vm525 = vweird.f32 %v519
  %vm526 = vweird.f32 %v520
  %vm527 = vmor %vm525, %vm526
  %v528 = vsel %vm527, %v520, %v524
  %v529 = vand.u32 2147483647, %v519
  %vm530 = vcmp.eq.f32.partialorder %v529, 8.507059e+37
  %v531 = vand.u32 %v519, 2147483648
  %v532 = vor.u32 1.1754944e-38, %v531
  %v533 = vsel %vm530, %v532, %v528
  %v534 = vmul.f32 %v509, %v533
  %v535 = vmin.f32 %v534, 1.0
  %v536 = vmax.f32 %v535, -1.0
  %v537 = vadd.f32 %v496, 1.0
  %v538 = vadd.f32 %v536, 1.0
  %v539 = vmul.f32 %v453, %v537
  %v540 = vmul.f32 %v454, %v538
  %541 = vst [vmem:[%s3] sm:$0xff] %v539
  %542 = vst [vmem:[%s3 + $0x8] sm:$0xff] %v540
  // Predicated region
  $region14: #{_forward_impl.1} parent=0 // pred_check
    _
  $region15: #{_forward_impl.1} parent=0 // pred_check_branch
    %544 = sbr.rel (0) target = $region17
  $region16: #{_forward_impl.1} parent=0 // pred_region
    _
  $region17: #{_forward_impl.1} parent=0 // pred_fallthru
    _
  // Predicated region
  $region18: #{_forward_impl.1} parent=0 // pred_check
    _
  $region19: #{_forward_impl.1} parent=0 // pred_check_branch
    %546 = sbr.rel (0) target = $region21
  $region20: #{_forward_impl.1} parent=0 // pred_region
    _
  $region21: #{_forward_impl.1} parent=0 // pred_fallthru
    _

</llo_original>
